<compile_context>
chip_gen: v7x
topology: tpu7x:2x2x1
jax: 0.10.0
libtpu: 0.0.40
codegen_flags: <defaults>
</compile_context>

<pallas_src>
import jax
import jax.numpy as jnp
import numpy as np
from jax.experimental import pallas as pl
from jax.experimental.pallas import tpu as pltpu

INPUT_DIM = 16   # stands in for data.shape[1] after `data[:, :-11]`
LATENT_DIM = 2
BATCH = 8

LANES = 128          # lane width of the parameter / output slabs
PARAM_ROWS = 64      # padded row count of the parameter slab (multiple of 8)

# Static row offsets inside the (PARAM_ROWS, 128) parameter slab.
# Each weight block starts on an 8-row (sublane-tile) boundary; its bias row follows.
W1_R, B1_R = 0, 16          # w1: (16, 7)  at lanes [0..7)
W2_R, B2_R = 24, 31         # w2: (7, 2)   at lanes [0..2)
WH_R, BH_R = 32, 34         # fused heads [wmu|wlv]: (2, 4) at lanes [16..20)
WD1_R, BD1_R = 40, 42       # wd1: (2, 2)  at lanes [0..2)
WD2_R, BD2_R = 48, 50       # wd2: (2, 7)  at lanes [0..7)
WD3_R, BD3_R = 56, 63       # wd3: (7, 16) at lanes [0..16)

OUT_OFF_MU = INPUT_DIM                  # lane offset of mu in the output slab
OUT_OFF_LV = INPUT_DIM + LATENT_DIM     # lane offset of logvar in the output slab


def vae_kernel(x_ref, eps_ref, p_ref, out_ref):
    """x_ref: (TB, 16); eps_ref: (TB, 2); p_ref: (64, 128) packed params (resident);
    out_ref: (TB, 128) = [recon | mu | logvar | 0...] written with one unmasked store."""
    x = x_ref[...]
    eps = eps_ref[...]
    p = p_ref[...]

    # Static slices out of the resident parameter slab (no extra DMAs).
    w1 = p[W1_R:W1_R + INPUT_DIM, 0:7]
    b1 = p[B1_R:B1_R + 1, 0:7]
    w2 = p[W2_R:W2_R + 7, 0:2]
    b2 = p[B2_R:B2_R + 1, 0:2]
    whp = p[WH_R:WH_R + 2, :]       # (2, 128): head weights live at lanes [16..20), zeros elsewhere
    bhp = p[BH_R:BH_R + 1, :]       # (1, 128)
    wd1 = p[WD1_R:WD1_R + LATENT_DIM, 0:2]
    bd1 = p[BD1_R:BD1_R + 1, 0:2]
    wd2 = p[WD2_R:WD2_R + 2, 0:7]
    bd2 = p[BD2_R:BD2_R + 1, 0:7]
    wd3p = p[WD3_R:WD3_R + 7, :]    # (7, 128): decoder-out weights at lanes [0..16), zeros elsewhere
    bd3p = p[BD3_R:BD3_R + 1, :]    # (1, 128)

    # --- encoder: the wide-K contractions stay on the MXU ---
    h = jnp.maximum(jnp.dot(x, w1, preferred_element_type=jnp.float32) + b1, 0.0)   # (TB, 7)
    h = jnp.maximum(jnp.dot(h, w2, preferred_element_type=jnp.float32) + b2, 0.0)   # (TB, 2)

    # --- fused mu/logvar heads: K=2 VPU MAC, computed directly at output lanes [16..20) ---
    ml128 = h[:, 0:1] * whp[0:1, :] + h[:, 1:2] * whp[1:2, :] + bhp                 # (TB, 128)
    mu = ml128[:, OUT_OFF_MU:OUT_OFF_MU + LATENT_DIM]                               # (TB, 2)
    logvar = ml128[:, OUT_OFF_LV:OUT_OFF_LV + LATENT_DIM]                           # (TB, 2)

    # --- reparameterize: z = mu + eps * exp(0.5 * logvar) ---
    z = mu + eps * jnp.exp(0.5 * logvar)                                            # (TB, 2)

    # --- decoder: K=2 layers on the VPU, final 7-wide layer on the MXU at N=128 ---
    d1 = jnp.maximum(z[:, 0:1] * wd1[0:1, :] + z[:, 1:2] * wd1[1:2, :] + bd1, 0.0)  # (TB, 2)
    d2 = jnp.maximum(d1[:, 0:1] * wd2[0:1, :] + d1[:, 1:2] * wd2[1:2, :] + bd2, 0.0)  # (TB, 7)
    recon128 = jnp.dot(d2, wd3p, preferred_element_type=jnp.float32) + bd3p         # (TB, 128)

    # recon128 has recon at lanes [0..16) and zeros elsewhere; ml128 has mu|logvar at
    # lanes [16..20) and zeros elsewhere -> one VPU add, one unmasked full-width store.
    out_ref[...] = recon128 + ml128


def make_params(key, input_dim, latent_dim):
    """Deterministic init mimicking PyTorch Linear (uniform in +-1/sqrt(fan_in)).
    Weights stored as (in, out); biases as (1, out)."""
    dims = [
        ("w1", (input_dim, 7)), ("b1", (1, 7)),
        ("w2", (7, 2)), ("b2", (1, 2)),
        ("wmu", (2, latent_dim)), ("bmu", (1, latent_dim)),
        ("wlv", (2, latent_dim)), ("blv", (1, latent_dim)),
        ("wd1", (latent_dim, 2)), ("bd1", (1, 2)),
        ("wd2", (2, 7)), ("bd2", (1, 7)),
        ("wd3", (7, input_dim)), ("bd3", (1, input_dim)),
    ]
    params = {}
    keys = jax.random.split(key, len(dims))
    for (name, shape), k in zip(dims, keys):
        fan_in = shape[0] if name.startswith("w") else max(shape[1], 1)
        bound = 1.0 / np.sqrt(fan_in)
        params[name] = jax.random.uniform(k, shape, jnp.float32, -bound, bound)
    return params


def pack_params(params):
    """Pack all weights/biases into a single (PARAM_ROWS, 128) f32 slab.
    Built ONCE, host-side with numpy -> no per-call device packing sub-graph."""
    slab = np.zeros((PARAM_ROWS, LANES), np.float32)

    def put(row, col, arr):
        a = np.asarray(arr, dtype=np.float32)
        slab[row:row + a.shape[0], col:col + a.shape[1]] = a

    put(W1_R, 0, params["w1"]); put(B1_R, 0, params["b1"])
    put(W2_R, 0, params["w2"]); put(B2_R, 0, params["b2"])
    wh = np.concatenate([np.asarray(params["wmu"]), np.asarray(params["wlv"])], axis=1)
    bh = np.concatenate([np.asarray(params["bmu"]), np.asarray(params["blv"])], axis=1)
    put(WH_R, OUT_OFF_MU, wh)   # head weights placed directly at output lane offset 16
    put(BH_R, OUT_OFF_MU, bh)
    put(WD1_R, 0, params["wd1"]); put(BD1_R, 0, params["bd1"])
    put(WD2_R, 0, params["wd2"]); put(BD2_R, 0, params["bd2"])
    put(WD3_R, 0, params["wd3"]); put(BD3_R, 0, params["bd3"])
    return jnp.asarray(slab)


def _round_up(x, m):
    return ((x + m - 1) // m) * m


def _choose_tb(batch):
    """Batch-tile rows: full array for small batches, else a multiple of 8 capped at
    2048 and chosen so the 'parallel' grid has >=2 steps (v7x megacore + pipelining).
    Note: if batch > 512 and batch % TB != 0 the last partial block reads padded rows;
    the garbage lanes pass through exp() but are masked on writeback (results correct)."""
    if batch <= 512:
        return batch                      # block == full array is always legal
    tb = _round_up(pl.cdiv(batch, 4), 8)  # >= 4 parallel steps for large batches
    return int(min(max(tb, 512), 2048))


@jax.jit
def vae_forward(x, eps, param_slab):
    B, D = x.shape
    assert D == INPUT_DIM and eps.shape == (B, LATENT_DIM)
    assert param_slab.shape == (PARAM_ROWS, LANES)

    TB = _choose_tb(B)
    grid = (pl.cdiv(B, TB),)

    out = pl.pallas_call(
        vae_kernel,
        out_shape=jax.ShapeDtypeStruct((B, LANES), jnp.float32),
        grid_spec=pltpu.PrefetchScalarGridSpec(
            num_scalar_prefetch=0,
            grid=grid,
            in_specs=[
                pl.BlockSpec((TB, INPUT_DIM), lambda i: (i, 0)),       # x, full width
                pl.BlockSpec((TB, LATENT_DIM), lambda i: (i, 0)),      # eps, full width
                pl.BlockSpec((PARAM_ROWS, LANES), lambda i: (0, 0)),   # param slab, resident
            ],
            out_specs=pl.BlockSpec((TB, LANES), lambda i: (i, 0)),
        ),
        compiler_params=pltpu.CompilerParams(
            dimension_semantics=("parallel",)),
    )(x, eps, param_slab)

    recon = out[:, 0:INPUT_DIM]
    mu = out[:, OUT_OFF_MU:OUT_OFF_MU + LATENT_DIM]
    logvar = out[:, OUT_OFF_LV:OUT_OFF_LV + LATENT_DIM]
    return recon, mu, logvar


def vae_forward_ref(x, params, eps):
    """Pure-JAX reference for correctness checking."""
    h = jnp.maximum(x @ params["w1"] + params["b1"], 0.0)
    h = jnp.maximum(h @ params["w2"] + params["b2"], 0.0)
    mu = h @ params["wmu"] + params["bmu"]
    logvar = h @ params["wlv"] + params["blv"]
    z = mu + eps * jnp.exp(0.5 * logvar)
    d = jnp.maximum(z @ params["wd1"] + params["bd1"], 0.0)
    d = jnp.maximum(d @ params["wd2"] + params["bd2"], 0.0)
    recon = d @ params["wd3"] + params["bd3"]
    return recon, mu, logvar


if __name__ == "__main__":
    key = jax.random.PRNGKey(0)
    k_x, k_eps, k_params = jax.random.split(key, 3)

    x = jax.random.normal(k_x, (BATCH, INPUT_DIM), dtype=jnp.float32)
    # torch.randn_like(std) equivalent: eps sampled deterministically outside the kernel.
    eps = jax.random.normal(k_eps, (BATCH, LATENT_DIM), dtype=jnp.float32)
    params = make_params(k_params, INPUT_DIM, LATENT_DIM)

    # Pack the parameters ONCE (host-side); reuse the slab for every forward call.
    param_slab = pack_params(params)

    recon, mu, logvar = jax.block_until_ready(vae_forward(x, eps, param_slab))
    recon_r, mu_r, logvar_r = vae_forward_ref(x, params, eps)

    np.testing.assert_allclose(np.asarray(recon), np.asarray(recon_r), rtol=2e-3, atol=2e-3)
    np.testing.assert_allclose(np.asarray(mu), np.asarray(mu_r), rtol=2e-3, atol=2e-3)
    np.testing.assert_allclose(np.asarray(logvar), np.asarray(logvar_r), rtol=2e-3, atol=2e-3)

    print("KERNEL_OK")
</pallas_src>

<mosaic_0001>
module attributes {stable_mosaic.version = 11 : i64} {
  func.func @vae_kernel(%arg0: i32, %arg1: memref<8x16xf32, #tpu.memory_space<vmem>>, %arg2: memref<8x2xf32, #tpu.memory_space<vmem>>, %arg3: memref<64x128xf32, #tpu.memory_space<vmem>>, %arg4: memref<8x128xf32, #tpu.memory_space<vmem>>) attributes {dimension_semantics = [#tpu.dimension_semantics<parallel>], iteration_bounds = array<i64: 1>, scalar_prefetch = 0 : i64, scratch_operands = 0 : i64, tpu.core_type = #tpu.core_type<tc>, window_params = [{transform_indices = @transform_0, window_bounds = array<i64: 8, 16>}, {transform_indices = @transform_1, window_bounds = array<i64: 8, 2>}, {pipeline_mode = #tpu.pipeline_mode<synchronous>, transform_indices = @transform_2, window_bounds = array<i64: 64, 128>}, {transform_indices = @transform_3, window_bounds = array<i64: 8, 128>}]} {
    %c0 = arith.constant 0 : index
    %c0_0 = arith.constant 0 : index
    %0 = vector.load %arg1[%c0, %c0_0] : memref<8x16xf32, #tpu.memory_space<vmem>>, vector<8x16xf32>
    %c0_1 = arith.constant 0 : index
    %c0_2 = arith.constant 0 : index
    %1 = vector.load %arg2[%c0_1, %c0_2] : memref<8x2xf32, #tpu.memory_space<vmem>>, vector<8x2xf32>
    %c0_3 = arith.constant 0 : index
    %c0_4 = arith.constant 0 : index
    %2 = vector.load %arg3[%c0_3, %c0_4] : memref<64x128xf32, #tpu.memory_space<vmem>>, vector<64x128xf32>
    %3 = vector.extract_strided_slice %2 {offsets = [0, 0], sizes = [16, 7], strides = [1, 1]} : vector<64x128xf32> to vector<16x7xf32>
    %4 = vector.extract_strided_slice %2 {offsets = [16, 0], sizes = [1, 7], strides = [1, 1]} : vector<64x128xf32> to vector<1x7xf32>
    %5 = vector.extract_strided_slice %2 {offsets = [24, 0], sizes = [7, 2], strides = [1, 1]} : vector<64x128xf32> to vector<7x2xf32>
    %6 = vector.extract_strided_slice %2 {offsets = [31, 0], sizes = [1, 2], strides = [1, 1]} : vector<64x128xf32> to vector<1x2xf32>
    %7 = vector.extract_strided_slice %2 {offsets = [32, 0], sizes = [2, 128], strides = [1, 1]} : vector<64x128xf32> to vector<2x128xf32>
    %8 = vector.extract_strided_slice %2 {offsets = [34, 0], sizes = [1, 128], strides = [1, 1]} : vector<64x128xf32> to vector<1x128xf32>
    %9 = vector.extract_strided_slice %2 {offsets = [40, 0], sizes = [2, 2], strides = [1, 1]} : vector<64x128xf32> to vector<2x2xf32>
    %10 = vector.extract_strided_slice %2 {offsets = [42, 0], sizes = [1, 2], strides = [1, 1]} : vector<64x128xf32> to vector<1x2xf32>
    %11 = vector.extract_strided_slice %2 {offsets = [48, 0], sizes = [2, 7], strides = [1, 1]} : vector<64x128xf32> to vector<2x7xf32>
    %12 = vector.extract_strided_slice %2 {offsets = [50, 0], sizes = [1, 7], strides = [1, 1]} : vector<64x128xf32> to vector<1x7xf32>
    %13 = vector.extract_strided_slice %2 {offsets = [56, 0], sizes = [7, 128], strides = [1, 1]} : vector<64x128xf32> to vector<7x128xf32>
    %14 = vector.extract_strided_slice %2 {offsets = [63, 0], sizes = [1, 128], strides = [1, 1]} : vector<64x128xf32> to vector<1x128xf32>
    %cst = arith.constant dense<0.000000e+00> : vector<8x7xf32>
    %15 = tpu.matmul %0, %3, %cst {dimension_numbers = #tpu.dot_dimension_numbers<[1], [0], [0], [1], [0, 0, 1, 1], [], []>} : vector<8x16xf32>, vector<16x7xf32>, vector<8x7xf32> -> vector<8x7xf32>
    %16 = vector.broadcast %4 : vector<1x7xf32> to vector<8x7xf32>
    %17 = arith.addf %15, %16 : vector<8x7xf32>
    %cst_5 = arith.constant 0.000000e+00 : f32
    %18 = vector.broadcast %cst_5 : f32 to vector<8x7xf32>
    %19 = arith.maximumf %17, %18 : vector<8x7xf32>
    %cst_6 = arith.constant dense<0.000000e+00> : vector<8x2xf32>
    %20 = tpu.matmul %19, %5, %cst_6 {dimension_numbers = #tpu.dot_dimension_numbers<[1], [0], [0], [1], [0, 0, 1, 1], [], []>} : vector<8x7xf32>, vector<7x2xf32>, vector<8x2xf32> -> vector<8x2xf32>
    %21 = vector.broadcast %6 : vector<1x2xf32> to vector<8x2xf32>
    %22 = arith.addf %20, %21 : vector<8x2xf32>
    %cst_7 = arith.constant 0.000000e+00 : f32
    %23 = vector.broadcast %cst_7 : f32 to vector<8x2xf32>
    %24 = arith.maximumf %22, %23 : vector<8x2xf32>
    %25 = vector.extract_strided_slice %24 {offsets = [0, 0], sizes = [8, 1], strides = [1, 1]} : vector<8x2xf32> to vector<8x1xf32>
    %26 = vector.extract_strided_slice %7 {offsets = [0, 0], sizes = [1, 128], strides = [1, 1]} : vector<2x128xf32> to vector<1x128xf32>
    %27 = vector.broadcast %25 : vector<8x1xf32> to vector<8x128xf32>
    %28 = vector.broadcast %26 : vector<1x128xf32> to vector<8x128xf32>
    %29 = arith.mulf %27, %28 : vector<8x128xf32>
    %30 = vector.extract_strided_slice %24 {offsets = [0, 1], sizes = [8, 1], strides = [1, 1]} : vector<8x2xf32> to vector<8x1xf32>
    %31 = vector.extract_strided_slice %7 {offsets = [1, 0], sizes = [1, 128], strides = [1, 1]} : vector<2x128xf32> to vector<1x128xf32>
    %32 = vector.broadcast %30 : vector<8x1xf32> to vector<8x128xf32>
    %33 = vector.broadcast %31 : vector<1x128xf32> to vector<8x128xf32>
    %34 = arith.mulf %32, %33 : vector<8x128xf32>
    %35 = arith.addf %29, %34 : vector<8x128xf32>
    %36 = vector.broadcast %8 : vector<1x128xf32> to vector<8x128xf32>
    %37 = arith.addf %35, %36 : vector<8x128xf32>
    %38 = vector.extract_strided_slice %37 {offsets = [0, 16], sizes = [8, 2], strides = [1, 1]} : vector<8x128xf32> to vector<8x2xf32>
    %39 = vector.extract_strided_slice %37 {offsets = [0, 18], sizes = [8, 2], strides = [1, 1]} : vector<8x128xf32> to vector<8x2xf32>
    %cst_8 = arith.constant 5.000000e-01 : f32
    %40 = vector.broadcast %cst_8 : f32 to vector<8x2xf32>
    %41 = arith.mulf %40, %39 : vector<8x2xf32>
    %42 = math.exp %41 : vector<8x2xf32>
    %43 = arith.mulf %1, %42 : vector<8x2xf32>
    %44 = arith.addf %38, %43 : vector<8x2xf32>
    %45 = vector.extract_strided_slice %44 {offsets = [0, 0], sizes = [8, 1], strides = [1, 1]} : vector<8x2xf32> to vector<8x1xf32>
    %46 = vector.extract_strided_slice %9 {offsets = [0, 0], sizes = [1, 2], strides = [1, 1]} : vector<2x2xf32> to vector<1x2xf32>
    %47 = vector.broadcast %45 : vector<8x1xf32> to vector<8x2xf32>
    %48 = vector.broadcast %46 : vector<1x2xf32> to vector<8x2xf32>
    %49 = arith.mulf %47, %48 : vector<8x2xf32>
    %50 = vector.extract_strided_slice %44 {offsets = [0, 1], sizes = [8, 1], strides = [1, 1]} : vector<8x2xf32> to vector<8x1xf32>
    %51 = vector.extract_strided_slice %9 {offsets = [1, 0], sizes = [1, 2], strides = [1, 1]} : vector<2x2xf32> to vector<1x2xf32>
    %52 = vector.broadcast %50 : vector<8x1xf32> to vector<8x2xf32>
    %53 = vector.broadcast %51 : vector<1x2xf32> to vector<8x2xf32>
    %54 = arith.mulf %52, %53 : vector<8x2xf32>
    %55 = arith.addf %49, %54 : vector<8x2xf32>
    %56 = vector.broadcast %10 : vector<1x2xf32> to vector<8x2xf32>
    %57 = arith.addf %55, %56 : vector<8x2xf32>
    %cst_9 = arith.constant 0.000000e+00 : f32
    %58 = vector.broadcast %cst_9 : f32 to vector<8x2xf32>
    %59 = arith.maximumf %57, %58 : vector<8x2xf32>
    %60 = vector.extract_strided_slice %59 {offsets = [0, 0], sizes = [8, 1], strides = [1, 1]} : vector<8x2xf32> to vector<8x1xf32>
    %61 = vector.extract_strided_slice %11 {offsets = [0, 0], sizes = [1, 7], strides = [1, 1]} : vector<2x7xf32> to vector<1x7xf32>
    %62 = vector.broadcast %60 : vector<8x1xf32> to vector<8x7xf32>
    %63 = vector.broadcast %61 : vector<1x7xf32> to vector<8x7xf32>
    %64 = arith.mulf %62, %63 : vector<8x7xf32>
    %65 = vector.extract_strided_slice %59 {offsets = [0, 1], sizes = [8, 1], strides = [1, 1]} : vector<8x2xf32> to vector<8x1xf32>
    %66 = vector.extract_strided_slice %11 {offsets = [1, 0], sizes = [1, 7], strides = [1, 1]} : vector<2x7xf32> to vector<1x7xf32>
    %67 = vector.broadcast %65 : vector<8x1xf32> to vector<8x7xf32>
    %68 = vector.broadcast %66 : vector<1x7xf32> to vector<8x7xf32>
    %69 = arith.mulf %67, %68 : vector<8x7xf32>
    %70 = arith.addf %64, %69 : vector<8x7xf32>
    %71 = vector.broadcast %12 : vector<1x7xf32> to vector<8x7xf32>
    %72 = arith.addf %70, %71 : vector<8x7xf32>
    %cst_10 = arith.constant 0.000000e+00 : f32
    %73 = vector.broadcast %cst_10 : f32 to vector<8x7xf32>
    %74 = arith.maximumf %72, %73 : vector<8x7xf32>
    %cst_11 = arith.constant dense<0.000000e+00> : vector<8x128xf32>
    %75 = tpu.matmul %74, %13, %cst_11 {dimension_numbers = #tpu.dot_dimension_numbers<[1], [0], [0], [1], [0, 0, 1, 1], [], []>} : vector<8x7xf32>, vector<7x128xf32>, vector<8x128xf32> -> vector<8x128xf32>
    %76 = vector.broadcast %14 : vector<1x128xf32> to vector<8x128xf32>
    %77 = arith.addf %75, %76 : vector<8x128xf32>
    %78 = arith.addf %77, %37 : vector<8x128xf32>
    %c0_12 = arith.constant 0 : index
    %c0_13 = arith.constant 0 : index
    %79 = vector.load %arg4[%c0_12, %c0_13] : memref<8x128xf32, #tpu.memory_space<vmem>>, vector<8x128xf32>
    tpu.vector_store %arg4[%c0_12, %c0_13], %78 {strides = array<i32>} : memref<8x128xf32, #tpu.memory_space<vmem>>, vector<8x128xf32>,
    return
  }
  func.func @transform_0(%arg0: i32) -> (i32, i32) {
    %c0_i32 = arith.constant 0 : i32
    %c0_i32_0 = arith.constant 0 : i32
    return %arg0, %c0_i32 : i32, i32
  }
  func.func @transform_1(%arg0: i32) -> (i32, i32) {
    %c0_i32 = arith.constant 0 : i32
    %c0_i32_0 = arith.constant 0 : i32
    return %arg0, %c0_i32 : i32, i32
  }
  func.func @transform_2(%arg0: i32) -> (i32, i32) {
    %c0_i32 = arith.constant 0 : i32
    %c0_i32_0 = arith.constant 0 : i32
    %c0_i32_1 = arith.constant 0 : i32
    return %c0_i32, %c0_i32_0 : i32, i32
  }
  func.func @transform_3(%arg0: i32) -> (i32, i32) {
    %c0_i32 = arith.constant 0 : i32
    %c0_i32_0 = arith.constant 0 : i32
    return %arg0, %c0_i32 : i32, i32
  }
}

</mosaic_0001>

<llo_original>
// kernel: vae_forward.1
$region0: #{vae_forward.1}
  #allocation0 [shape = 'u32[]', space=smem, size = 0x4, offset = 0x4, fixed_abs, tag = 'smem constant byte address 0x4 - core index']
  #allocation1 [shape = 'u32[144,128]{1,0:T(1,128)}', space=vmem, size = 0x12000, scoped, tag = 'internal scratch']
  %s0 = inlined_call_operand.vmem [shape: f32[8,16], index: 0, kind: input, shape index: {}]
  %s1 = inlined_call_operand.vmem [shape: f32[8,2], index: 1, kind: input, shape index: {}]
  %s2 = inlined_call_operand.hbm [shape: f32[64,128], index: 2, kind: input, shape index: {}]
  %s3 = inlined_call_operand.vmem [shape: f32[8,128], index: 3, kind: output, shape index: {}]
  %s4 = sld [smem:[#allocation0]]
  $region26: #{vae_forward.1} parent=0
    _
  %s6 = ssub.s32 1, %s4
  %s7 = scalar_select 0, %s6, %s4
  $region1: #{vae_forward.1} parent=0
    #allocation2 [shape = 'u8[32768]{0}', space=vmem, size = 0x8000, scoped, tag = 'input window, operand 2, single buffered']
    #allocation3 [shape = 's32[1]{0}', space=sflag, size = 0x4, scoped, tag = 'scoped memory for vae_forward.1']
    %8 = vsyncpa [#allocation3], 0
    // Predicated region
    $region2: #{vae_forward.1} parent=1 // pred_check
      _
    $region3: #{vae_forward.1} parent=1 // pred_check_branch
      %10 = sbr.rel (0) target = $region5
    $region4: #{vae_forward.1} parent=1 // pred_region
      _
    $region5: #{vae_forward.1} parent=1 // pred_fallthru
      _
    // Predicated region
    $region6: #{vae_forward.1} parent=1 // pred_check
      _
    $region7: #{vae_forward.1} parent=1 // pred_check_branch
      %12 = sbr.rel (0) target = $region9
    $region8: #{vae_forward.1} parent=1 // pred_region
      _
    $region9: #{vae_forward.1} parent=1 // pred_fallthru
      _
    // Predicated region
    $region10: #{vae_forward.1} parent=1 // pred_check
      _
    $region11: #{vae_forward.1} parent=1 // pred_check_branch
      %14 = sbr.rel (0) target = $region13
    $region12: #{vae_forward.1} parent=1 // pred_region
      %s16 = ssub.s32 1024, 1024
      %17 = vsyncadd [#allocation3], %s16
      %s18 = sshll.u32 [#allocation2], 4
      %s19 = int_to_ptr.vmem [resolvable:$true] %s18
      %24 = dma.hbm_to_vmem [thread:$0]  %s2, 1024, %s19, [#allocation3], 128, 128, 8
    $region13: #{vae_forward.1} parent=1 // pred_fallthru
      _
    // Predicated region
    $region14: #{vae_forward.1} parent=1 // pred_check
      _
    $region15: #{vae_forward.1} parent=1 // pred_check_branch
      %26 = sbr.rel (0) target = $region17
    $region16: #{vae_forward.1} parent=1 // pred_region
      %27 = dma.done [#allocation3], 1024
    $region17: #{vae_forward.1} parent=1 // pred_fallthru
      _
    %v28 = vld [vmem:[%s0] sm:$0xff]
    %v29 = vld [vmem:[%s1] sm:$0xff]
    %v30 = vld [vmem:[#allocation2] sm:$0xff]
    %v31 = vld [vmem:[#allocation2 + $0x8] sm:$0xff]
    %v32 = vld [vmem:[#allocation2 + $0x10] sm:$0xff]
    %v33 = vld [vmem:[#allocation2 + $0x18] sm:$0xff]
    %v34 = vld [vmem:[#allocation2 + $0x20] sm:$0xff]
    %v35 = vld [vmem:[#allocation2 + $0x28] sm:$0xff]
    %v36 = vld [vmem:[#allocation2 + $0x30] sm:$0xff]
    %v37 = vld [vmem:[#allocation2 + $0x38] sm:$0xff]
    %v38 = vlaneseq
    %v39 = vshrl.u32 %v38, 7
    %v40 = vsub.s32 0, %v39
    %v41 = vrot.slane %v32, %v40
    %vm42 = vcmask 130048
    %v44 = vsel %vm42, %v28, 0
    %46 = vmatprep.subr.mxu0 0.0
    %47 = vmatpush1.msra.mxu0 %v30
    %48 = vmatprep.subr.mxu0 0.0
    %49 = vmatpush1.msra.mxu0 %v31
    %50 = vmatprep.subr.mxu0 0.0
    %51 = vmatpush1.msra.mxu0 0.0
    %52 = vmatprep.subr.mxu0 0.0
    %53 = vmatpush1.msra.mxu0 0.0
    %54 = vmatprep.subr.mxu0 0.0
    %55 = vmatpush1.msra.mxu0 0.0
    %56 = vmatprep.subr.mxu0 0.0
    %57 = vmatpush1.msra.mxu0 0.0
    %58 = vmatprep.subr.mxu0 0.0
    %59 = vmatpush1.msra.mxu0 0.0
    %60 = vmatprep.subr.mxu0 0.0
    %61 = vmatpush1.msra.mxu0 0.0
    %62 = vmatprep.subr.mxu0 0.0
    %63 = vmatpush1.msra.mxu0 0.0
    %64 = vmatprep.subr.mxu0 0.0
    %65 = vmatpush1.msra.mxu0 0.0
    %66 = vmatprep.subr.mxu0 0.0
    %67 = vmatpush1.msra.mxu0 0.0
    %68 = vmatprep.subr.mxu0 0.0
    %69 = vmatpush1.msra.mxu0 0.0
    %70 = vmatprep.subr.mxu0 0.0
    %71 = vmatpush1.msra.mxu0 0.0
    %72 = vmatprep.subr.mxu0 0.0
    %73 = vmatpush1.msra.mxu0 0.0
    %74 = vmatprep.subr.mxu0 0.0
    %75 = vmatpush1.msra.mxu0 0.0
    %76 = vmatprep.subr.mxu0 0.0
    %77 = vmatpush1.msra.mxu0 0.0
    %78 = vmatprep.subr.mxu0 0.0
    %79 = vmatpush1.msra.mxu0 0.0
    %80 = vmatprep.subr.mxu0 0.0
    %81 = vmatpush1.msra.mxu0 0.0
    %82 = vmatprep.subr.mxu0 0.0
    %83 = vmatpush1.msra.mxu0 0.0
    %84 = vmatprep.subr.mxu0 0.0
    %85 = vmatpush1.msra.mxu0 0.0
    %86 = vmatprep.subr.mxu0 0.0
    %87 = vmatpush1.msra.mxu0 0.0
    %88 = vmatprep.subr.mxu0 0.0
    %89 = vmatpush1.msra.mxu0 0.0
    %90 = vmatprep.subr.mxu0 0.0
    %91 = vmatpush1.msra.mxu0 0.0
    %92 = vmatprep.subr.mxu0 0.0
    %93 = vmatpush1.msra.mxu0 0.0
    %94 = vmatprep.subr.mxu0 0.0
    %95 = vmatpush1.msra.mxu0 0.0
    %96 = vmatprep.subr.mxu0 0.0
    %97 = vmatpush1.msra.mxu0 0.0
    %98 = vmatprep.subr.mxu0 0.0
    %99 = vmatpush1.msra.mxu0 0.0
    %100 = vmatprep.subr.mxu0 0.0
    %101 = vmatpush1.msra.mxu0 0.0
    %102 = vmatprep.subr.mxu0 0.0
    %103 = vmatpush1.msra.mxu0 0.0
    %104 = vmatprep.subr.mxu0 0.0
    %105 = vmatpush1.msra.mxu0 0.0
    %106 = vmatprep.subr.mxu0 0.0
    %107 = vmatpush1.msra.mxu0 0.0
    %108 = vmatprep.subr.mxu0 0.0
    %109 = vmatpush1.msra.mxu0 0.0
    %110 = vmatprep.mubr.f32.mxu0 0.0
    %111 = vmatmul.mubr.f32.gmra.mrb[0].mxu0 %v44
    %v112 = vpop.f32.mrb[0].mxu0
    %v113 = vadd.f32 %v41, %v112
    %v114 = vpop.f32.mrb[0].mxu0
    %115 = vdwg.mxu0
    %v116 = vmax.f32 %v113, 0.0
    %v117 = vlaneseq
    %v118 = vshrl.u32 %v117, 7
    %v119 = vsub.s32 7, %v118
    %v120 = vrot.slane %v33, %v119
    %vm121 = vcmask 56320
    %v123 = vsel %vm121, %v116, 0
    %vm125 = vcmask 1046528
    %v127 = vsel %vm125, %v33, 0
    %129 = vmatprep.subr.mxu0 0.0
    %130 = vmatpush1.msra.mxu0 %v127
    %131 = vmatprep.subr.mxu0 0.0
    %132 = vmatpush1.msra.mxu0 0.0
    %133 = vmatprep.subr.mxu0 0.0
    %134 = vmatpush1.msra.mxu0 0.0
    %135 = vmatprep.subr.mxu0 0.0
    %136 = vmatpush1.msra.mxu0 0.0
    %137 = vmatprep.subr.mxu0 0.0
    %138 = vmatpush1.msra.mxu0 0.0
    %139 = vmatprep.subr.mxu0 0.0
    %140 = vmatpush1.msra.mxu0 0.0
    %141 = vmatprep.subr.mxu0 0.0
    %142 = vmatpush1.msra.mxu0 0.0
    %143 = vmatprep.subr.mxu0 0.0
    %144 = vmatpush1.msra.mxu0 0.0
    %145 = vmatprep.subr.mxu0 0.0
    %146 = vmatpush1.msra.mxu0 0.0
    %147 = vmatprep.subr.mxu0 0.0
    %148 = vmatpush1.msra.mxu0 0.0
    %149 = vmatprep.subr.mxu0 0.0
    %150 = vmatpush1.msra.mxu0 0.0
    %151 = vmatprep.subr.mxu0 0.0
    %152 = vmatpush1.msra.mxu0 0.0
    %153 = vmatprep.subr.mxu0 0.0
    %154 = vmatpush1.msra.mxu0 0.0
    %155 = vmatprep.subr.mxu0 0.0
    %156 = vmatpush1.msra.mxu0 0.0
    %157 = vmatprep.subr.mxu0 0.0
    %158 = vmatpush1.msra.mxu0 0.0
    %159 = vmatprep.subr.mxu0 0.0
    %160 = vmatpush1.msra.mxu0 0.0
    %161 = vmatprep.subr.mxu0 0.0
    %162 = vmatpush1.msra.mxu0 0.0
    %163 = vmatprep.subr.mxu0 0.0
    %164 = vmatpush1.msra.mxu0 0.0
    %165 = vmatprep.subr.mxu0 0.0
    %166 = vmatpush1.msra.mxu0 0.0
    %167 = vmatprep.subr.mxu0 0.0
    %168 = vmatpush1.msra.mxu0 0.0
    %169 = vmatprep.subr.mxu0 0.0
    %170 = vmatpush1.msra.mxu0 0.0
    %171 = vmatprep.subr.mxu0 0.0
    %172 = vmatpush1.msra.mxu0 0.0
    %173 = vmatprep.subr.mxu0 0.0
    %174 = vmatpush1.msra.mxu0 0.0
    %175 = vmatprep.subr.mxu0 0.0
    %176 = vmatpush1.msra.mxu0 0.0
    %177 = vmatprep.subr.mxu0 0.0
    %178 = vmatpush1.msra.mxu0 0.0
    %179 = vmatprep.subr.mxu0 0.0
    %180 = vmatpush1.msra.mxu0 0.0
    %181 = vmatprep.subr.mxu0 0.0
    %182 = vmatpush1.msra.mxu0 0.0
    %183 = vmatprep.subr.mxu0 0.0
    %184 = vmatpush1.msra.mxu0 0.0
    %185 = vmatprep.subr.mxu0 0.0
    %186 = vmatpush1.msra.mxu0 0.0
    %187 = vmatprep.subr.mxu0 0.0
    %188 = vmatpush1.msra.mxu0 0.0
    %189 = vmatprep.subr.mxu0 0.0
    %190 = vmatpush1.msra.mxu0 0.0
    %191 = vmatprep.subr.mxu0 0.0
    %192 = vmatpush1.msra.mxu0 0.0
    %193 = vmatprep.mubr.f32.mxu0 0.0
    %194 = vmatmul.mubr.f32.gmra.mrb[0].mxu0 %v123
    %v195 = vpop.f32.mrb[0].mxu0
    %v196 = vadd.f32 %v120, %v195
    %v197 = vpop.f32.mrb[0].mxu0
    %198 = vdwg.mxu0
    %v199 = vmax.f32 %v196, 0.0
    %201 = vset.pattern.permute.xlu0 0
    %202 = vperm.xlu0 %201, %v199
    %v203 = vpop.permute.xlu0 %202
    %v205 = vlaneseq
    %v206 = vshrl.u32 %v205, 7
    %v207 = vsub.s32 0, %v206
    %v208 = vrot.slane %v34, %v207
    %v209 = vmul.f32 %v203, %v208
    %210 = vset.pattern.permute.xlu0 1
    %211 = vperm.xlu0 %210, %v199
    %v212 = vpop.permute.xlu0 %211
    %v214 = vlaneseq
    %v215 = vshrl.u32 %v214, 7
    %v216 = vsub.s32 1, %v215
    %v217 = vrot.slane %v34, %v216
    %v218 = vmul.f32 %v212, %v217
    %v219 = vadd.f32 %v209, %v218
    %v220 = vlaneseq
    %v221 = vshrl.u32 %v220, 7
    %v222 = vsub.s32 2, %v221
    %v223 = vrot.slane %v34, %v222
    %v224 = vadd.f32 %v219, %v223
    %v225 = vmul.f32 %v224, 0.5
    %v226 = vmul.f32 %v225, 1.442695
    %v227 = vpow.pop %v226
    %229 = vrot.lane.b32.xlu0 %v227, 110
    %v230 = vpop.permute.xlu0 %229
    %v232 = vmul.f32 %v29, %v230
    %234 = vrot.lane.b32.xlu0 %v232, 16
    %v235 = vpop.permute.xlu0 %234
    %v237 = vadd.f32 %v224, %v235
    %239 = vset.pattern.permute.xlu0 16
    %240 = vperm.xlu0 %239, %v237
    %v241 = vpop.permute.xlu0 %240
    %v243 = vlaneseq
    %v244 = vshrl.u32 %v243, 7
    %v245 = vsub.s32 0, %v244
    %v246 = vrot.slane %v35, %v245
    %v247 = vmul.f32 %v241, %v246
    %248 = vset.pattern.permute.xlu0 17
    %249 = vperm.xlu0 %248, %v237
    %v250 = vpop.permute.xlu0 %249
    %v252 = vlaneseq
    %v253 = vshrl.u32 %v252, 7
    %v254 = vsub.s32 1, %v253
    %v255 = vrot.slane %v35, %v254
    %v256 = vmul.f32 %v250, %v255
    %v257 = vadd.f32 %v247, %v256
    %v258 = vlaneseq
    %v259 = vshrl.u32 %v258, 7
    %v260 = vsub.s32 2, %v259
    %v261 = vrot.slane %v35, %v260
    %v262 = vadd.f32 %v257, %v261
    %v263 = vmax.f32 %v262, 0.0
    %265 = vset.pattern.permute.xlu0 0
    %266 = vperm.xlu0 %265, %v263
    %v267 = vpop.permute.xlu0 %266
    %v269 = vlaneseq
    %v270 = vshrl.u32 %v269, 7
    %v271 = vsub.s32 0, %v270
    %v272 = vrot.slane %v36, %v271
    %v273 = vmul.f32 %v267, %v272
    %274 = vset.pattern.permute.xlu0 1
    %275 = vperm.xlu0 %274, %v263
    %v276 = vpop.permute.xlu0 %275
    %v278 = vlaneseq
    %v279 = vshrl.u32 %v278, 7
    %v280 = vsub.s32 1, %v279
    %v281 = vrot.slane %v36, %v280
    %v282 = vmul.f32 %v276, %v281
    %v283 = vadd.f32 %v273, %v282
    %v284 = vlaneseq
    %v285 = vshrl.u32 %v284, 7
    %v286 = vsub.s32 2, %v285
    %v287 = vrot.slane %v36, %v286
    %v288 = vadd.f32 %v283, %v287
    %v289 = vmax.f32 %v288, 0.0
    %v290 = vlaneseq
    %v291 = vshrl.u32 %v290, 7
    %v292 = vsub.s32 7, %v291
    %v293 = vrot.slane %v37, %v292
    %v295 = vsel %vm121, %v289, 0
    %v298 = vsel %vm125, %v37, 0
    %300 = vmatprep.subr.mxu0 0.0
    %301 = vmatpush1.msra.mxu0 %v298
    %302 = vmatprep.subr.mxu0 0.0
    %303 = vmatpush1.msra.mxu0 0.0
    %304 = vmatprep.subr.mxu0 0.0
    %305 = vmatpush1.msra.mxu0 0.0
    %306 = vmatprep.subr.mxu0 0.0
    %307 = vmatpush1.msra.mxu0 0.0
    %308 = vmatprep.subr.mxu0 0.0
    %309 = vmatpush1.msra.mxu0 0.0
    %310 = vmatprep.subr.mxu0 0.0
    %311 = vmatpush1.msra.mxu0 0.0
    %312 = vmatprep.subr.mxu0 0.0
    %313 = vmatpush1.msra.mxu0 0.0
    %314 = vmatprep.subr.mxu0 0.0
    %315 = vmatpush1.msra.mxu0 0.0
    %316 = vmatprep.subr.mxu0 0.0
    %317 = vmatpush1.msra.mxu0 0.0
    %318 = vmatprep.subr.mxu0 0.0
    %319 = vmatpush1.msra.mxu0 0.0
    %320 = vmatprep.subr.mxu0 0.0
    %321 = vmatpush1.msra.mxu0 0.0
    %322 = vmatprep.subr.mxu0 0.0
    %323 = vmatpush1.msra.mxu0 0.0
    %324 = vmatprep.subr.mxu0 0.0
    %325 = vmatpush1.msra.mxu0 0.0
    %326 = vmatprep.subr.mxu0 0.0
    %327 = vmatpush1.msra.mxu0 0.0
    %328 = vmatprep.subr.mxu0 0.0
    %329 = vmatpush1.msra.mxu0 0.0
    %330 = vmatprep.subr.mxu0 0.0
    %331 = vmatpush1.msra.mxu0 0.0
    %332 = vmatprep.subr.mxu0 0.0
    %333 = vmatpush1.msra.mxu0 0.0
    %334 = vmatprep.subr.mxu0 0.0
    %335 = vmatpush1.msra.mxu0 0.0
    %336 = vmatprep.subr.mxu0 0.0
    %337 = vmatpush1.msra.mxu0 0.0
    %338 = vmatprep.subr.mxu0 0.0
    %339 = vmatpush1.msra.mxu0 0.0
    %340 = vmatprep.subr.mxu0 0.0
    %341 = vmatpush1.msra.mxu0 0.0
    %342 = vmatprep.subr.mxu0 0.0
    %343 = vmatpush1.msra.mxu0 0.0
    %344 = vmatprep.subr.mxu0 0.0
    %345 = vmatpush1.msra.mxu0 0.0
    %346 = vmatprep.subr.mxu0 0.0
    %347 = vmatpush1.msra.mxu0 0.0
    %348 = vmatprep.subr.mxu0 0.0
    %349 = vmatpush1.msra.mxu0 0.0
    %350 = vmatprep.subr.mxu0 0.0
    %351 = vmatpush1.msra.mxu0 0.0
    %352 = vmatprep.subr.mxu0 0.0
    %353 = vmatpush1.msra.mxu0 0.0
    %354 = vmatprep.subr.mxu0 0.0
    %355 = vmatpush1.msra.mxu0 0.0
    %356 = vmatprep.subr.mxu0 0.0
    %357 = vmatpush1.msra.mxu0 0.0
    %358 = vmatprep.subr.mxu0 0.0
    %359 = vmatpush1.msra.mxu0 0.0
    %360 = vmatprep.subr.mxu0 0.0
    %361 = vmatpush1.msra.mxu0 0.0
    %362 = vmatprep.subr.mxu0 0.0
    %363 = vmatpush1.msra.mxu0 0.0
    %364 = vmatprep.mubr.f32.mxu0 0.0
    %365 = vmatmul.mubr.f32.gmra.mrb[0].mxu0 %v295
    %v366 = vpop.f32.mrb[0].mxu0
    %v367 = vadd.f32 %v293, %v366
    %v368 = vpop.f32.mrb[0].mxu0
    %369 = vdwg.mxu0
    %v370 = vadd.f32 %v367, %v224
    %371 = vst [vmem:[%s3] sm:$0xff] %v370
    // Predicated region
    $region18: #{vae_forward.1} parent=1 // pred_check
      _
    $region19: #{vae_forward.1} parent=1 // pred_check_branch
      %373 = sbr.rel (0) target = $region21
    $region20: #{vae_forward.1} parent=1 // pred_region
      _
    $region21: #{vae_forward.1} parent=1 // pred_fallthru
      _
    // Predicated region
    $region22: #{vae_forward.1} parent=1 // pred_check
      _
    $region23: #{vae_forward.1} parent=1 // pred_check_branch
      %375 = sbr.rel (0) target = $region25
    $region24: #{vae_forward.1} parent=1 // pred_region
      _
    $region25: #{vae_forward.1} parent=1 // pred_fallthru
      _
    %376 = vsyncpa [#allocation3], 1

</llo_original>
